<compile_context>
chip_gen: v5e
topology: v5e:2x2
jax: 0.10.0
libtpu: 0.0.40
codegen_flags: <defaults>
</compile_context>

<pallas_src>
import jax
import jax.numpy as jnp
from jax.experimental import pallas as pl
from jax.experimental.pallas import tpu as pltpu


_LANES = 128
_SUBLANES = 8
_MIN_PALLAS_BYTES = 128 << 10   # below this, plain XLA fusion wins


def _blend_kernel(x1_ref, x2_ref, out_ref):
    # Pure VPU work: out = 0.8 * x1 + 0.2 * x2 (HBM-bound; VALU has huge slack)
    out_ref[...] = 0.8 * x1_ref[...] + 0.2 * x2_ref[...]


def _tile_params():
    """Return (per-array tile bytes, vmem_limit_bytes), generation-aware."""
    try:
        vmem = pltpu.get_tpu_info().vmem_capacity_bytes
    except Exception:
        vmem = 128 << 20                    # conservative default (v5e/v6e class)
    if vmem <= (64 << 20):                  # v7x-class: 64 MiB per TensorCore
        tile = 6 << 20
    else:                                   # v5e / v6e class: 128 MiB VMEM
        tile = 4 << 20
    # Working set = 3 arrays x 2 buffers x tile; keep limit >= that + headroom,
    # and always below physical VMEM.
    limit = int(min(vmem - (8 << 20), max(32 << 20, 8 * tile)))
    return tile, limit


def _tiled_blend_lane_dense(x1_flat, x2_flat, n):
    """Blend two flat length-n arrays via a lane-dense (rows, 128) kernel."""
    dtype = x1_flat.dtype
    itemsize = jnp.dtype(dtype).itemsize
    tile_bytes, vmem_limit = _tile_params()

    # Rows for a (rows, 128) view, rounded up to a sublane (8) multiple.
    rows = pl.cdiv(n, _LANES)
    rows = pl.cdiv(rows, _SUBLANES) * _SUBLANES

    # Largest row-tile (multiple of 8) such that one (tm, 128) tile <= tile_bytes.
    max_tm = max(_SUBLANES,
                 (tile_bytes // (itemsize * _LANES)) // _SUBLANES * _SUBLANES)

    # >= 2 grid steps whenever the input is non-trivial (v7x: both TCs get work),
    # and tm chosen so it divides the padded row count exactly: no ragged last
    # block, no masked stores, balanced load between TensorCores.
    min_steps = 2 if rows >= 2 * _SUBLANES else 1
    num_steps = max(min_steps, pl.cdiv(rows, max_tm))
    tm = pl.cdiv(pl.cdiv(rows, num_steps), _SUBLANES) * _SUBLANES
    rows_p = num_steps * tm                 # padded rows; pad < 8*num_steps rows

    pad_n = rows_p * _LANES
    if pad_n != n:
        x1_flat = jnp.pad(x1_flat, (0, pad_n - n))
        x2_flat = jnp.pad(x2_flat, (0, pad_n - n))
    x1_2d = x1_flat.reshape(rows_p, _LANES)
    x2_2d = x2_flat.reshape(rows_p, _LANES)

    spec = pl.BlockSpec((tm, _LANES), lambda i: (i, 0))

    out = pl.pallas_call(
        _blend_kernel,
        out_shape=jax.ShapeDtypeStruct((rows_p, _LANES), dtype),
        grid=(num_steps,),
        in_specs=[spec, spec],
        out_specs=spec,
        compiler_params=pltpu.CompilerParams(
            dimension_semantics=("parallel",),   # shard across TCs on v7x
            vmem_limit_bytes=vmem_limit,
        ),
    )(x1_2d, x2_2d)

    return out.reshape(-1)[:n]


def gate_layer(input1, input2, w1=None, b1=None, w2=None, b2=None,
               min_pallas_bytes=_MIN_PALLAS_BYTES):
    """GateLayer.forward.

    input1, input2: (..., input_dim). The Linear parameters (w1/b1/w2/b2) are
    accepted for API parity with the PyTorch module but are intentionally
    unused: the module's gate is dead code and the returned value is the fixed
    0.8/0.2 blend of the two inputs.
    """
    assert input1.shape == input2.shape
    orig_shape = input1.shape
    n = input1.size
    itemsize = jnp.dtype(input1.dtype).itemsize

    # Tiny inputs: launch overhead dominates; let XLA fuse the blend directly.
    if n * itemsize < min_pallas_bytes:
        return (0.8 * input1 + 0.2 * input2).astype(input1.dtype)

    out_flat = _tiled_blend_lane_dense(input1.reshape(-1), input2.reshape(-1), n)
    return out_flat.reshape(orig_shape).astype(input1.dtype)


def _torch_style_linear_init(key, in_features, out_features):
    """Deterministic init mimicking nn.Linear default (uniform +/- 1/sqrt(in))."""
    kw, kb = jax.random.split(key)
    bound = 1.0 / jnp.sqrt(jnp.float32(in_features))
    w = jax.random.uniform(kw, (in_features, out_features), jnp.float32, -bound, bound)
    b = jax.random.uniform(kb, (out_features,), jnp.float32, -bound, bound)
    return w, b


if __name__ == "__main__":
    input_dim = 32
    batch, seq = 2, 8

    key = jax.random.PRNGKey(0)
    k1, k2, k3, k4, k5, k6, kp1, kp2 = jax.random.split(key, 8)

    # Module-consistent demo inputs (2, 8, 32).
    a_small = jax.random.normal(k1, (batch, seq, input_dim), jnp.float32)
    b_small = jax.random.normal(k2, (batch, seq, input_dim), jnp.float32)

    # GateLayer parameters exist on the module (Linear(2D->D), Linear(D->1))
    # but its forward never uses them for the returned value; created only to
    # mirror the constructor.
    w1, b1 = _torch_style_linear_init(kp1, 2 * input_dim, input_dim)
    w2, b2 = _torch_style_linear_init(kp2, input_dim, 1)

    # Larger input exercising the multi-step pipelined grid (>= 2 blocks).
    a_big = jax.random.normal(k3, (2, 128, 256), jnp.float32)
    b_big = jax.random.normal(k4, (2, 128, 256), jnp.float32)

    # Non-128-divisible element count exercising the pad-and-slice path.
    a_odd = jax.random.normal(k5, (3, 37, 45), jnp.float32)
    b_odd = jax.random.normal(k6, (3, 37, 45), jnp.float32)

    cases = [
        (a_small, b_small, 0),                  # force Pallas at the demo shape
        (a_small, b_small, _MIN_PALLAS_BYTES),  # tiny -> plain-JAX fast path
        (a_big, b_big, _MIN_PALLAS_BYTES),      # Pallas path, 2 grid steps
        (a_odd, b_odd, 0),                      # Pallas path with padding
    ]
    for x1, x2, thresh in cases:
        out = gate_layer(x1, x2, w1, b1, w2, b2, min_pallas_bytes=thresh)
        out = jax.block_until_ready(out)
        ref = 0.8 * x1 + 0.2 * x2
        assert out.shape == x1.shape
        assert out.dtype == x1.dtype
        assert jnp.allclose(out, ref, atol=1e-6, rtol=1e-6), "mismatch vs reference"

    print("KERNEL_OK")
</pallas_src>

<mosaic_0001>
module attributes {stable_mosaic.version = 11 : i64} {
  func.func @_blend_kernel(%arg0: i32, %arg1: memref<8x128xf32, #tpu.memory_space<vmem>>, %arg2: memref<8x128xf32, #tpu.memory_space<vmem>>, %arg3: memref<8x128xf32, #tpu.memory_space<vmem>>) attributes {dimension_semantics = [#tpu.dimension_semantics<parallel>], iteration_bounds = array<i64: 1>, scalar_prefetch = 0 : i64, scratch_operands = 0 : i64, tpu.core_type = #tpu.core_type<tc>, window_params = [{transform_indices = @transform_0, window_bounds = array<i64: 8, 128>}, {transform_indices = @transform_1, window_bounds = array<i64: 8, 128>}, {transform_indices = @transform_2, window_bounds = array<i64: 8, 128>}]} {
    %c0 = arith.constant 0 : index
    %c0_0 = arith.constant 0 : index
    %0 = vector.load %arg1[%c0, %c0_0] : memref<8x128xf32, #tpu.memory_space<vmem>>, vector<8x128xf32>
    %cst = arith.constant 8.000000e-01 : f32
    %1 = vector.broadcast %cst : f32 to vector<8x128xf32>
    %2 = arith.mulf %1, %0 : vector<8x128xf32>
    %c0_1 = arith.constant 0 : index
    %c0_2 = arith.constant 0 : index
    %3 = vector.load %arg2[%c0_1, %c0_2] : memref<8x128xf32, #tpu.memory_space<vmem>>, vector<8x128xf32>
    %cst_3 = arith.constant 2.000000e-01 : f32
    %4 = vector.broadcast %cst_3 : f32 to vector<8x128xf32>
    %5 = arith.mulf %4, %3 : vector<8x128xf32>
    %6 = arith.addf %2, %5 : vector<8x128xf32>
    %c0_4 = arith.constant 0 : index
    %c0_5 = arith.constant 0 : index
    %7 = vector.load %arg3[%c0_4, %c0_5] : memref<8x128xf32, #tpu.memory_space<vmem>>, vector<8x128xf32>
    tpu.vector_store %arg3[%c0_4, %c0_5], %6 {strides = array<i32>} : memref<8x128xf32, #tpu.memory_space<vmem>>, vector<8x128xf32>,
    return
  }
  func.func @transform_0(%arg0: i32) -> (i32, i32) {
    %c0_i32 = arith.constant 0 : i32
    %c0_i32_0 = arith.constant 0 : i32
    return %arg0, %c0_i32 : i32, i32
  }
  func.func @transform_1(%arg0: i32) -> (i32, i32) {
    %c0_i32 = arith.constant 0 : i32
    %c0_i32_0 = arith.constant 0 : i32
    return %arg0, %c0_i32 : i32, i32
  }
  func.func @transform_2(%arg0: i32) -> (i32, i32) {
    %c0_i32 = arith.constant 0 : i32
    %c0_i32_0 = arith.constant 0 : i32
    return %arg0, %c0_i32 : i32, i32
  }
}

</mosaic_0001>

<llo_original>
// kernel: tpu_custom_call.1
$region0: #{tpu_custom_call.1}
  #allocation0 [shape = 'u32[]', space=smem, size = 0x4, offset = 0x4, fixed_abs, tag = 'smem constant byte address 0x4 - core index']
  #allocation1 [shape = 'u32[72,128]{1,0:T(1,128)}', space=vmem, size = 0x9000, scoped, tag = 'internal scratch']
  %s0 = inlined_call_operand.hbm [shape: f32[8,128], index: 0, kind: input, shape index: {}]
  %s1 = inlined_call_operand.hbm [shape: f32[8,128], index: 1, kind: input, shape index: {}]
  %s2 = inlined_call_operand.hbm [shape: f32[8,128], index: 2, kind: output, shape index: {}]
  %s3 = sld [smem:[#allocation0]]
  $region26: #{tpu_custom_call.1} parent=0
    _
  %s5 = ssub.s32 1, %s3
  %s6 = scalar_select 0, %s5, %s3
  $region1: #{tpu_custom_call.1} parent=0
    #allocation2 [shape = 'u8[4096]{0}', space=vmem, size = 0x1000, scoped, tag = 'input window, operand 0, single buffered']
    #allocation3 [shape = 's32[1]{0}', space=sflag, size = 0x4, scoped, tag = 'scoped memory for tpu_custom_call.1']
    #allocation4 [shape = 's32[1]{0}', space=sflag, size = 0x4, scoped, tag = 'scoped memory for tpu_custom_call.1']
    #allocation5 [shape = 'u8[4096]{0}', space=vmem, size = 0x1000, scoped, tag = 'input window, operand 1, single buffered']
    #allocation6 [shape = 's32[1]{0}', space=sflag, size = 0x4, scoped, tag = 'scoped memory for tpu_custom_call.1']
    #allocation7 [shape = 'u8[4096]{0}', space=vmem, size = 0x1000, scoped, tag = 'output window, operand 0, single buffered']
    %7 = vsyncpa [#allocation3], 0
    %8 = vsyncpa [#allocation6], 0
    %9 = vsyncpa [#allocation4], 0
    // Predicated region
    $region2: #{tpu_custom_call.1} parent=1 // pred_check
      _
    $region3: #{tpu_custom_call.1} parent=1 // pred_check_branch
      %11 = sbr.rel (0) target = $region5
    $region4: #{tpu_custom_call.1} parent=1 // pred_region
      %13 = vsyncadd [#allocation3], 0
      %s15 = sshll.u32 %s0, 4
      %s16 = int_to_ptr.hbm [resolvable:$true] %s15
      %s17 = sshll.u32 [#allocation2], 4
      %s18 = int_to_ptr.vmem [resolvable:$true] %s17
      %20 = dma.hbm_to_vmem [thread:$0]  %s16, 128, %s18, [#allocation3]
    $region5: #{tpu_custom_call.1} parent=1 // pred_fallthru
      _
    // Predicated region
    $region6: #{tpu_custom_call.1} parent=1 // pred_check
      _
    $region7: #{tpu_custom_call.1} parent=1 // pred_check_branch
      %22 = sbr.rel (0) target = $region9
    $region8: #{tpu_custom_call.1} parent=1 // pred_region
      %24 = vsyncadd [#allocation6], 0
      %s26 = sshll.u32 %s1, 4
      %s27 = int_to_ptr.hbm [resolvable:$true] %s26
      %s28 = sshll.u32 [#allocation5], 4
      %s29 = int_to_ptr.vmem [resolvable:$true] %s28
      %31 = dma.hbm_to_vmem [thread:$0]  %s27, 128, %s29, [#allocation6]
    $region9: #{tpu_custom_call.1} parent=1 // pred_fallthru
      _
    // Predicated region
    $region10: #{tpu_custom_call.1} parent=1 // pred_check
      _
    $region11: #{tpu_custom_call.1} parent=1 // pred_check_branch
      %33 = sbr.rel (0) target = $region13
    $region12: #{tpu_custom_call.1} parent=1 // pred_region
      %35 = dma.done [#allocation3], 128
    $region13: #{tpu_custom_call.1} parent=1 // pred_fallthru
      _
    // Predicated region
    $region14: #{tpu_custom_call.1} parent=1 // pred_check
      _
    $region15: #{tpu_custom_call.1} parent=1 // pred_check_branch
      %37 = sbr.rel (0) target = $region17
    $region16: #{tpu_custom_call.1} parent=1 // pred_region
      %39 = dma.done [#allocation6], 128
    $region17: #{tpu_custom_call.1} parent=1 // pred_fallthru
      _
    %v40 = vld [vmem:[#allocation2] sm:$0xff]
    %v41 = vmul.f32 %v40, 0.8
    %v42 = vld [vmem:[#allocation5] sm:$0xff]
    %v43 = vmul.f32 %v42, 0.2
    %v44 = vadd.f32 %v41, %v43
    %45 = vst [vmem:[#allocation7] sm:$0xff] %v44
    // Predicated region
    $region18: #{tpu_custom_call.1} parent=1 // pred_check
      _
    $region19: #{tpu_custom_call.1} parent=1 // pred_check_branch
      %47 = sbr.rel (0) target = $region21
    $region20: #{tpu_custom_call.1} parent=1 // pred_region
      %49 = vsyncadd [#allocation4], 0
      %s51 = sshll.u32 [#allocation7], 4
      %s52 = int_to_ptr.vmem [resolvable:$true] %s51
      %s53 = sshll.u32 %s2, 4
      %s54 = int_to_ptr.hbm [resolvable:$true] %s53
      %56 = dma.vmem_to_hbm [thread:$0]  %s52, 128, %s54, [#allocation4]
    $region21: #{tpu_custom_call.1} parent=1 // pred_fallthru
      _
    // Predicated region
    $region22: #{tpu_custom_call.1} parent=1 // pred_check
      _
    $region23: #{tpu_custom_call.1} parent=1 // pred_check_branch
      %58 = sbr.rel (0) target = $region25
    $region24: #{tpu_custom_call.1} parent=1 // pred_region
      %60 = dma.done [#allocation4], 128
    $region25: #{tpu_custom_call.1} parent=1 // pred_fallthru
      _
    %61 = vsyncpa [#allocation3], 1
    %62 = vsyncpa [#allocation6], 1
    %63 = vsyncpa [#allocation4], 1

</llo_original>
